<compile_context>
chip_gen: v7x
topology: tpu7x:2x2x1
jax: 0.10.0
libtpu: 0.0.40
codegen_flags: <defaults>
</compile_context>

<pallas_src>
import jax
import jax.numpy as jnp
from jax.experimental import pallas as pl
from jax.experimental.pallas import tpu as pltpu

_IN = 100     # input features
_HID = 100    # logical hidden features
_HP = 128     # padded hidden features (lane width)
_OUT = 10     # output classes


def _mlp_kernel(x_ref, w1_ref, b1_ref, w2_ref, b2_ref, w3_ref, b3_ref, o_ref):
    # fc1 + ReLU  (bf16 MXU inputs, f32 accumulate / elementwise)
    x = x_ref[...]
    if x.dtype != jnp.bfloat16:
        x = x.astype(jnp.bfloat16)
    h1 = jnp.dot(x, w1_ref[...], preferred_element_type=jnp.float32) + b1_ref[...]
    h1 = jnp.maximum(h1, 0.0).astype(jnp.bfloat16)

    # fc2 + ReLU
    h2 = jnp.dot(h1, w2_ref[...], preferred_element_type=jnp.float32) + b2_ref[...]
    h2 = jnp.maximum(h2, 0.0).astype(jnp.bfloat16)

    # fc3
    logits = jnp.dot(h2, w3_ref[...], preferred_element_type=jnp.float32) + b3_ref[...]

    # log_softmax over the (unpadded) class axis, numerically stable, all f32
    m = jnp.max(logits, axis=-1, keepdims=True)
    shifted = logits - m
    lse = jnp.log(jnp.sum(jnp.exp(shifted), axis=-1, keepdims=True))
    o_ref[...] = (shifted - lse).astype(o_ref.dtype)


def _round_up(n, m):
    return ((n + m - 1) // m) * m


def init_params(key):
    """PyTorch-style init: U(-1/sqrt(fan_in), 1/sqrt(fan_in)), logical (unpadded) f32.

    Weights stored (in_features, out_features); biases (1, out_features).
    """
    dims = [(_IN, _HID), (_HID, _HID), (_HID, _OUT)]
    params = []
    for fan_in, fan_out in dims:
        key, kw, kb = jax.random.split(key, 3)
        bound = 1.0 / float(fan_in) ** 0.5
        w = jax.random.uniform(kw, (fan_in, fan_out), jnp.float32, -bound, bound)
        b = jax.random.uniform(kb, (1, fan_out), jnp.float32, -bound, bound)
        params.extend([w, b])
    return tuple(params)


def pack_params(params):
    """Zero-pad resident weights to lane-friendly shapes and cast matmul weights to bf16.

    w1: (100,128) bf16   b1: (1,128) f32
    w2: (128,128) bf16   b2: (1,128) f32
    w3: (128, 10) bf16   b3: (1, 10) f32
    Padded hidden columns are exactly 0 after bias-add and ReLU, and multiply zero
    rows of the next weight, so the real 10 logits are unchanged.
    """
    w1, b1, w2, b2, w3, b3 = params
    w1p = jnp.zeros((_IN, _HP), jnp.float32).at[:, :_HID].set(w1).astype(jnp.bfloat16)
    b1p = jnp.zeros((1, _HP), jnp.float32).at[:, :_HID].set(b1)
    w2p = jnp.zeros((_HP, _HP), jnp.float32).at[:_HID, :_HID].set(w2).astype(jnp.bfloat16)
    b2p = jnp.zeros((1, _HP), jnp.float32).at[:, :_HID].set(b2)
    w3p = jnp.zeros((_HP, _OUT), jnp.float32).at[:_HID, :].set(w3).astype(jnp.bfloat16)
    b3p = b3.astype(jnp.float32)
    return (w1p, b1p, w2p, b2p, w3p, b3p)


def _choose_tile(B, tb):
    """Pick a batch tile TB (multiple of 16) and padded batch B_pad.

    Prefers the largest tile up to `tb` for HBM-bound efficiency; if that would
    leave a single grid step but the batch can be split, halve the work per step
    so the 'parallel' batch axis keeps >= 2 steps for the 2 TensorCores on v7x.
    """
    TB = min(tb, _round_up(B, 16))
    B_pad = _round_up(B, TB)
    if B_pad // TB == 1 and B_pad > 16:
        TB2 = _round_up((B_pad + 1) // 2, 16)
        B_pad2 = _round_up(B, TB2)
        if B_pad2 // TB2 >= 2:
            TB, B_pad = TB2, B_pad2
    return TB, B_pad


def net_forward(x, packed_params, *, tb=4096):
    """x: [B, 100] float32 (or bfloat16) -> [B, 10] float32 log-probabilities."""
    w1, b1, w2, b2, w3, b3 = packed_params
    B, F = x.shape
    assert F == _IN, F

    TB, B_pad = _choose_tile(B, tb)
    if B_pad != B:
        x = jnp.pad(x, ((0, B_pad - B), (0, 0)))
    grid = (B_pad // TB,)

    const = lambda i: (0, 0)  # resident weights: same block every grid step

    flops = B_pad * 2 * (_IN * _HP + _HP * _HP + _HP * _OUT)
    bytes_accessed = (
        int(x.size) * x.dtype.itemsize
        + B_pad * _OUT * 4
        + sum(int(p.size) * p.dtype.itemsize for p in packed_params)
    )
    cost = pl.CostEstimate(
        flops=flops,
        transcendentals=B_pad * (_OUT + 1),  # exp per class + log per row
        bytes_accessed=bytes_accessed,
    )

    out = pl.pallas_call(
        _mlp_kernel,
        out_shape=jax.ShapeDtypeStruct((B_pad, _OUT), jnp.float32),
        grid=grid,
        in_specs=[
            pl.BlockSpec((TB, _IN), lambda i: (i, 0)),
            pl.BlockSpec(w1.shape, const),
            pl.BlockSpec(b1.shape, const),
            pl.BlockSpec(w2.shape, const),
            pl.BlockSpec(b2.shape, const),
            pl.BlockSpec(w3.shape, const),
            pl.BlockSpec(b3.shape, const),
        ],
        out_specs=pl.BlockSpec((TB, _OUT), lambda i: (i, 0)),
        compiler_params=pltpu.CompilerParams(
            dimension_semantics=("parallel",),
            vmem_limit_bytes=48 * 1024 * 1024,
        ),
        cost_estimate=cost,
    )(x, w1, b1, w2, b2, w3, b3)
    return out[:B]


def reference_forward(x, params):
    """Pure-JAX reference mirroring the kernel's bf16-matmul / f32-accumulate path,
    using the logical (unpadded) weights."""
    w1, b1, w2, b2, w3, b3 = params
    bf = jnp.bfloat16
    h1 = jnp.maximum(
        jnp.dot(x.astype(bf), w1.astype(bf), preferred_element_type=jnp.float32) + b1, 0.0)
    h2 = jnp.maximum(
        jnp.dot(h1.astype(bf), w2.astype(bf), preferred_element_type=jnp.float32) + b2, 0.0)
    logits = jnp.dot(h2.astype(bf), w3.astype(bf), preferred_element_type=jnp.float32) + b3
    return jax.nn.log_softmax(logits, axis=1)


if __name__ == "__main__":
    key = jax.random.PRNGKey(0)
    key, kx = jax.random.split(key)

    B = 8  # small demo batch; kernel tiles/pads any B
    x = jax.random.normal(kx, (B, _IN), dtype=jnp.float32)

    params = init_params(key)          # logical f32 params (PyTorch layout)
    packed = pack_params(params)       # padded bf16/f32 params for the kernel

    out = jax.block_until_ready(net_forward(x, packed))
    ref = reference_forward(x, params)

    assert out.shape == (B, _OUT), out.shape
    assert bool(jnp.all(jnp.isfinite(out))), "non-finite output"
    assert jnp.allclose(out, ref, atol=2e-3, rtol=2e-3), (
        "mismatch vs reference, max abs err = %g" % float(jnp.max(jnp.abs(out - ref))))

    print("KERNEL_OK")
</pallas_src>

<mosaic_0001>
module attributes {stable_mosaic.version = 11 : i64} {
  func.func @_mlp_kernel(%arg0: i32, %arg1: memref<16x100xf32, #tpu.memory_space<vmem>>, %arg2: memref<100x128xbf16, #tpu.memory_space<vmem>>, %arg3: memref<1x128xf32, #tpu.memory_space<vmem>>, %arg4: memref<128x128xbf16, #tpu.memory_space<vmem>>, %arg5: memref<1x128xf32, #tpu.memory_space<vmem>>, %arg6: memref<128x10xbf16, #tpu.memory_space<vmem>>, %arg7: memref<1x10xf32, #tpu.memory_space<vmem>>, %arg8: memref<16x10xf32, #tpu.memory_space<vmem>>) attributes {dimension_semantics = [#tpu.dimension_semantics<parallel>], iteration_bounds = array<i64: 1>, scalar_prefetch = 0 : i64, scratch_operands = 0 : i64, tpu.core_type = #tpu.core_type<tc>, window_params = [{transform_indices = @transform_0, window_bounds = array<i64: 16, 100>}, {pipeline_mode = #tpu.pipeline_mode<synchronous>, transform_indices = @transform_1, window_bounds = array<i64: 100, 128>}, {pipeline_mode = #tpu.pipeline_mode<synchronous>, transform_indices = @transform_2, window_bounds = array<i64: 1, 128>}, {pipeline_mode = #tpu.pipeline_mode<synchronous>, transform_indices = @transform_3, window_bounds = array<i64: 128, 128>}, {pipeline_mode = #tpu.pipeline_mode<synchronous>, transform_indices = @transform_4, window_bounds = array<i64: 1, 128>}, {pipeline_mode = #tpu.pipeline_mode<synchronous>, transform_indices = @transform_5, window_bounds = array<i64: 128, 10>}, {pipeline_mode = #tpu.pipeline_mode<synchronous>, transform_indices = @transform_6, window_bounds = array<i64: 1, 10>}, {transform_indices = @transform_7, window_bounds = array<i64: 16, 10>}]} {
    %c0 = arith.constant 0 : index
    %c0_0 = arith.constant 0 : index
    %0 = vector.load %arg1[%c0, %c0_0] : memref<16x100xf32, #tpu.memory_space<vmem>>, vector<16x100xf32>
    %1 = arith.truncf %0 : vector<16x100xf32> to vector<16x100xbf16>
    %c0_1 = arith.constant 0 : index
    %c0_2 = arith.constant 0 : index
    %2 = vector.load %arg2[%c0_1, %c0_2] : memref<100x128xbf16, #tpu.memory_space<vmem>>, vector<100x128xbf16>
    %cst = arith.constant dense<0.000000e+00> : vector<16x128xf32>
    %3 = tpu.matmul %1, %2, %cst {dimension_numbers = #tpu.dot_dimension_numbers<[1], [0], [0], [1], [0, 0, 1, 1], [], []>} : vector<16x100xbf16>, vector<100x128xbf16>, vector<16x128xf32> -> vector<16x128xf32>
    %c0_3 = arith.constant 0 : index
    %c0_4 = arith.constant 0 : index
    %4 = vector.load %arg3[%c0_3, %c0_4] : memref<1x128xf32, #tpu.memory_space<vmem>>, vector<1x128xf32>
    %5 = vector.broadcast %4 : vector<1x128xf32> to vector<16x128xf32>
    %6 = arith.addf %3, %5 : vector<16x128xf32>
    %cst_5 = arith.constant 0.000000e+00 : f32
    %7 = vector.broadcast %cst_5 : f32 to vector<16x128xf32>
    %8 = arith.maximumf %6, %7 : vector<16x128xf32>
    %9 = arith.truncf %8 : vector<16x128xf32> to vector<16x128xbf16>
    %c0_6 = arith.constant 0 : index
    %c0_7 = arith.constant 0 : index
    %10 = vector.load %arg4[%c0_6, %c0_7] : memref<128x128xbf16, #tpu.memory_space<vmem>>, vector<128x128xbf16>
    %cst_8 = arith.constant dense<0.000000e+00> : vector<16x128xf32>
    %11 = tpu.matmul %9, %10, %cst_8 {dimension_numbers = #tpu.dot_dimension_numbers<[1], [0], [0], [1], [0, 0, 1, 1], [], []>} : vector<16x128xbf16>, vector<128x128xbf16>, vector<16x128xf32> -> vector<16x128xf32>
    %c0_9 = arith.constant 0 : index
    %c0_10 = arith.constant 0 : index
    %12 = vector.load %arg5[%c0_9, %c0_10] : memref<1x128xf32, #tpu.memory_space<vmem>>, vector<1x128xf32>
    %13 = vector.broadcast %12 : vector<1x128xf32> to vector<16x128xf32>
    %14 = arith.addf %11, %13 : vector<16x128xf32>
    %cst_11 = arith.constant 0.000000e+00 : f32
    %15 = vector.broadcast %cst_11 : f32 to vector<16x128xf32>
    %16 = arith.maximumf %14, %15 : vector<16x128xf32>
    %17 = arith.truncf %16 : vector<16x128xf32> to vector<16x128xbf16>
    %c0_12 = arith.constant 0 : index
    %c0_13 = arith.constant 0 : index
    %18 = vector.load %arg6[%c0_12, %c0_13] : memref<128x10xbf16, #tpu.memory_space<vmem>>, vector<128x10xbf16>
    %cst_14 = arith.constant dense<0.000000e+00> : vector<16x10xf32>
    %19 = tpu.matmul %17, %18, %cst_14 {dimension_numbers = #tpu.dot_dimension_numbers<[1], [0], [0], [1], [0, 0, 1, 1], [], []>} : vector<16x128xbf16>, vector<128x10xbf16>, vector<16x10xf32> -> vector<16x10xf32>
    %c0_15 = arith.constant 0 : index
    %c0_16 = arith.constant 0 : index
    %20 = vector.load %arg7[%c0_15, %c0_16] : memref<1x10xf32, #tpu.memory_space<vmem>>, vector<1x10xf32>
    %21 = vector.broadcast %20 : vector<1x10xf32> to vector<16x10xf32>
    %22 = arith.addf %19, %21 : vector<16x10xf32>
    %cst_17 = arith.constant dense<0xFF800000> : vector<16xf32>
    %23 = vector.multi_reduction <maximumf>, %22, %cst_17 [1] : vector<16x10xf32> to vector<16xf32>
    %24 = vector.shape_cast %23 : vector<16xf32> to vector<16x1xf32>
    %25 = vector.broadcast %24 : vector<16x1xf32> to vector<16x10xf32>
    %26 = arith.subf %22, %25 : vector<16x10xf32>
    %27 = math.exp %26 : vector<16x10xf32>
    %cst_18 = arith.constant dense<0.000000e+00> : vector<16xf32>
    %28 = vector.multi_reduction <add>, %27, %cst_18 [1] : vector<16x10xf32> to vector<16xf32>
    %29 = vector.shape_cast %28 : vector<16xf32> to vector<16x1xf32>
    %30 = math.log %29 : vector<16x1xf32>
    %31 = vector.broadcast %30 : vector<16x1xf32> to vector<16x10xf32>
    %32 = arith.subf %26, %31 : vector<16x10xf32>
    %c0_19 = arith.constant 0 : index
    %c0_20 = arith.constant 0 : index
    %33 = vector.load %arg8[%c0_19, %c0_20] : memref<16x10xf32, #tpu.memory_space<vmem>>, vector<16x10xf32>
    tpu.vector_store %arg8[%c0_19, %c0_20], %32 {strides = array<i32>} : memref<16x10xf32, #tpu.memory_space<vmem>>, vector<16x10xf32>,
    return
  }
  func.func @transform_0(%arg0: i32) -> (i32, i32) {
    %c0_i32 = arith.constant 0 : i32
    %c0_i32_0 = arith.constant 0 : i32
    return %arg0, %c0_i32 : i32, i32
  }
  func.func @transform_1(%arg0: i32) -> (i32, i32) {
    %c0_i32 = arith.constant 0 : i32
    %c0_i32_0 = arith.constant 0 : i32
    %c0_i32_1 = arith.constant 0 : i32
    return %c0_i32, %c0_i32_0 : i32, i32
  }
  func.func @transform_2(%arg0: i32) -> (i32, i32) {
    %c0_i32 = arith.constant 0 : i32
    %c0_i32_0 = arith.constant 0 : i32
    %c0_i32_1 = arith.constant 0 : i32
    return %c0_i32, %c0_i32_0 : i32, i32
  }
  func.func @transform_3(%arg0: i32) -> (i32, i32) {
    %c0_i32 = arith.constant 0 : i32
    %c0_i32_0 = arith.constant 0 : i32
    %c0_i32_1 = arith.constant 0 : i32
    return %c0_i32, %c0_i32_0 : i32, i32
  }
  func.func @transform_4(%arg0: i32) -> (i32, i32) {
    %c0_i32 = arith.constant 0 : i32
    %c0_i32_0 = arith.constant 0 : i32
    %c0_i32_1 = arith.constant 0 : i32
    return %c0_i32, %c0_i32_0 : i32, i32
  }
  func.func @transform_5(%arg0: i32) -> (i32, i32) {
    %c0_i32 = arith.constant 0 : i32
    %c0_i32_0 = arith.constant 0 : i32
    %c0_i32_1 = arith.constant 0 : i32
    return %c0_i32, %c0_i32_0 : i32, i32
  }
  func.func @transform_6(%arg0: i32) -> (i32, i32) {
    %c0_i32 = arith.constant 0 : i32
    %c0_i32_0 = arith.constant 0 : i32
    %c0_i32_1 = arith.constant 0 : i32
    return %c0_i32, %c0_i32_0 : i32, i32
  }
  func.func @transform_7(%arg0: i32) -> (i32, i32) {
    %c0_i32 = arith.constant 0 : i32
    %c0_i32_0 = arith.constant 0 : i32
    return %arg0, %c0_i32 : i32, i32
  }
}

</mosaic_0001>

<llo_original>
// kernel: tpu_custom_call.1
$region0: #{tpu_custom_call.1}
  #allocation0 [shape = 'u32[]', space=smem, size = 0x4, offset = 0x4, fixed_abs, tag = 'smem constant byte address 0x4 - core index']
  #allocation1 [shape = 'u32[144,128]{1,0:T(1,128)}', space=vmem, size = 0x12000, scoped, tag = 'internal scratch']
  %s0 = inlined_call_operand.vmem [shape: f32[16,100], index: 0, kind: input, shape index: {}]
  %s1 = inlined_call_operand.hbm [shape: bf16[100,128], index: 1, kind: input, shape index: {}]
  %s2 = inlined_call_operand.vmem [shape: f32[1,128], index: 2, kind: input, shape index: {}]
  %s3 = inlined_call_operand.vmem [shape: bf16[128,128], index: 3, kind: input, shape index: {}]
  %s4 = inlined_call_operand.vmem [shape: f32[1,128], index: 4, kind: input, shape index: {}]
  %s5 = inlined_call_operand.vmem [shape: bf16[128,10], index: 5, kind: input, shape index: {}]
  %s6 = inlined_call_operand.vmem [shape: f32[1,10], index: 6, kind: input, shape index: {}]
  %s7 = inlined_call_operand.hbm [shape: f32[16,10], index: 7, kind: output, shape index: {}]
  %s8 = sld [smem:[#allocation0]]
  $region42: #{tpu_custom_call.1} parent=0
    _
  %s10 = ssub.s32 1, %s8
  %s11 = scalar_select 0, %s10, %s8
  $region1: #{tpu_custom_call.1} parent=0
    #allocation2 [shape = 'u8[26624]{0}', space=vmem, size = 0x6800, scoped, tag = 'input window, operand 1, single buffered']
    #allocation3 [shape = 's32[1]{0}', space=sflag, size = 0x4, scoped, tag = 'scoped memory for tpu_custom_call.1']
    #allocation4 [shape = 's32[1]{0}', space=sflag, size = 0x4, scoped, tag = 'scoped memory for tpu_custom_call.1']
    #allocation5 [shape = 'u8[8192]{0}', space=vmem, size = 0x2000, scoped, tag = 'output window, operand 0, single buffered']
    %12 = vsyncpa [#allocation3], 0
    %13 = vsyncpa [#allocation4], 0
    // Predicated region
    $region2: #{tpu_custom_call.1} parent=1 // pred_check
      _
    $region3: #{tpu_custom_call.1} parent=1 // pred_check_branch
      %15 = sbr.rel (0) target = $region5
    $region4: #{tpu_custom_call.1} parent=1 // pred_region
      _
    $region5: #{tpu_custom_call.1} parent=1 // pred_fallthru
      _
    // Predicated region
    $region6: #{tpu_custom_call.1} parent=1 // pred_check
      _
    $region7: #{tpu_custom_call.1} parent=1 // pred_check_branch
      %17 = sbr.rel (0) target = $region9
    $region8: #{tpu_custom_call.1} parent=1 // pred_region
      %s19 = ssub.s32 832, 832
      %20 = vsyncadd [#allocation3], %s19
      %s21 = sshll.u32 [#allocation2], 4
      %s22 = int_to_ptr.vmem [resolvable:$true] %s21
      %27 = dma.hbm_to_vmem [thread:$0]  %s1, 832, %s22, [#allocation3], 64, 64, 4
    $region9: #{tpu_custom_call.1} parent=1 // pred_fallthru
      _
    // Predicated region
    $region10: #{tpu_custom_call.1} parent=1 // pred_check
      _
    $region11: #{tpu_custom_call.1} parent=1 // pred_check_branch
      %29 = sbr.rel (0) target = $region13
    $region12: #{tpu_custom_call.1} parent=1 // pred_region
      _
    $region13: #{tpu_custom_call.1} parent=1 // pred_fallthru
      _
    // Predicated region
    $region14: #{tpu_custom_call.1} parent=1 // pred_check
      _
    $region15: #{tpu_custom_call.1} parent=1 // pred_check_branch
      %31 = sbr.rel (0) target = $region17
    $region16: #{tpu_custom_call.1} parent=1 // pred_region
      _
    $region17: #{tpu_custom_call.1} parent=1 // pred_fallthru
      _
    // Predicated region
    $region18: #{tpu_custom_call.1} parent=1 // pred_check
      _
    $region19: #{tpu_custom_call.1} parent=1 // pred_check_branch
      %33 = sbr.rel (0) target = $region21
    $region20: #{tpu_custom_call.1} parent=1 // pred_region
      _
    $region21: #{tpu_custom_call.1} parent=1 // pred_fallthru
      _
    // Predicated region
    $region22: #{tpu_custom_call.1} parent=1 // pred_check
      _
    $region23: #{tpu_custom_call.1} parent=1 // pred_check_branch
      %35 = sbr.rel (0) target = $region25
    $region24: #{tpu_custom_call.1} parent=1 // pred_region
      _
    $region25: #{tpu_custom_call.1} parent=1 // pred_fallthru
      _
    // Predicated region
    $region26: #{tpu_custom_call.1} parent=1 // pred_check
      _
    $region27: #{tpu_custom_call.1} parent=1 // pred_check_branch
      %37 = sbr.rel (0) target = $region29
    $region28: #{tpu_custom_call.1} parent=1 // pred_region
      _
    $region29: #{tpu_custom_call.1} parent=1 // pred_fallthru
      _
    // Predicated region
    $region30: #{tpu_custom_call.1} parent=1 // pred_check
      _
    $region31: #{tpu_custom_call.1} parent=1 // pred_check_branch
      %39 = sbr.rel (0) target = $region33
    $region32: #{tpu_custom_call.1} parent=1 // pred_region
      %40 = dma.done [#allocation3], 832
    $region33: #{tpu_custom_call.1} parent=1 // pred_fallthru
      _
    %v42 = vld [vmem:[%s0] sm:$0xff]
    %v43 = vld [vmem:[%s0 + $0x8] sm:$0xff]
    %v44 = vpack.c.bf16 %v43, %v42
    %v45 = vld [vmem:[#allocation2] sm:$0xf]
    %v46 = vld [vmem:[#allocation2 + $0x4] sm:$0xf]
    %v47 = vld [vmem:[#allocation2 + $0x8] sm:$0xf]
    %v48 = vld [vmem:[#allocation2 + $0xc] sm:$0xf]
    %v49 = vld [vmem:[#allocation2 + $0x10] sm:$0xf]
    %v50 = vld [vmem:[#allocation2 + $0x14] sm:$0xf]
    %v51 = vld [vmem:[#allocation2 + $0x18] sm:$0xf]
    %v52 = vld [vmem:[#allocation2 + $0x1c] sm:$0xf]
    %v53 = vld [vmem:[#allocation2 + $0x20] sm:$0xf]
    %v54 = vld [vmem:[#allocation2 + $0x24] sm:$0xf]
    %v55 = vld [vmem:[#allocation2 + $0x28] sm:$0xf]
    %v56 = vld [vmem:[#allocation2 + $0x2c] sm:$0xf]
    %v57 = vld [vmem:[#allocation2 + $0x30] sm:$0x3]
    %v58 = vld [vmem:[%s2] sm:$0x1]
    %v60 = vlaneseq
    %v61 = vshrl.u32 %v60, 7
    %v62 = vsub.s32 0, %v61
    %v63 = vrot.slane %v58, %v62
    %v78 = vunpack.c.l.b16 %v45
    %v79 = vunpack.c.l.b16 %v46
    %v80 = vunpack.c.l.b16 %v47
    %v81 = vunpack.c.l.b16 %v48
    %v82 = vunpack.c.l.b16 %v49
    %v83 = vunpack.c.l.b16 %v50
    %v84 = vunpack.c.l.b16 %v51
    %v85 = vunpack.c.l.b16 %v52
    %v86 = vunpack.c.l.b16 %v53
    %v87 = vunpack.c.l.b16 %v54
    %v88 = vunpack.c.l.b16 %v55
    %v89 = vunpack.c.l.b16 %v56
    %v90 = vunpack.c.l.b16 %v57
    %v91 = vpack.c.b16 %v79, %v78
    %v92 = vpack.c.b16 %v81, %v80
    %v93 = vpack.c.b16 %v83, %v82
    %v94 = vpack.c.b16 %v85, %v84
    %v95 = vpack.c.b16 %v87, %v86
    %v96 = vpack.c.b16 %v89, %v88
    %v97 = vpack.c.b16 %v90, %v90
    %vm104 = vcmask 818176
    %v106 = vsel %vm104, %v44, 0
    %vm108 = vcmask 1041408
    %v110 = vsel %vm108, %v97, 0
    %112 = vmatprep.subr.bf16.mxu0 0
    %113 = vmatpush1.bf16.msra.mxu0 %v91
    %114 = vmatprep.subr.bf16.mxu0 0
    %115 = vmatpush1.bf16.msra.mxu0 %v92
    %116 = vmatprep.subr.bf16.mxu0 0
    %117 = vmatpush1.bf16.msra.mxu0 %v93
    %118 = vmatprep.subr.bf16.mxu0 0
    %119 = vmatpush1.bf16.msra.mxu0 %v94
    %120 = vmatprep.subr.bf16.mxu0 0
    %121 = vmatpush1.bf16.msra.mxu0 %v95
    %122 = vmatprep.subr.bf16.mxu0 0
    %123 = vmatpush1.bf16.msra.mxu0 %v96
    %124 = vmatprep.subr.bf16.mxu0 0
    %125 = vmatpush1.bf16.msra.mxu0 %v110
    %126 = vmatprep.subr.bf16.mxu0 0
    %127 = vmatpush1.bf16.msra.mxu0 0
    %128 = vmatprep.subr.bf16.mxu0 0
    %129 = vmatpush1.bf16.msra.mxu0 0
    %130 = vmatprep.subr.bf16.mxu0 0
    %131 = vmatpush1.bf16.msra.mxu0 0
    %132 = vmatprep.subr.bf16.mxu0 0
    %133 = vmatpush1.bf16.msra.mxu0 0
    %134 = vmatprep.subr.bf16.mxu0 0
    %135 = vmatpush1.bf16.msra.mxu0 0
    %136 = vmatprep.subr.bf16.mxu0 0
    %137 = vmatpush1.bf16.msra.mxu0 0
    %138 = vmatprep.subr.bf16.mxu0 0
    %139 = vmatpush1.bf16.msra.mxu0 0
    %140 = vmatprep.subr.bf16.mxu0 0
    %141 = vmatpush1.bf16.msra.mxu0 0
    %142 = vmatprep.subr.bf16.mxu0 0
    %143 = vmatpush1.bf16.msra.mxu0 0
    %144 = vmatprep.mubr.bf16.mxu0 0
    %145 = vmatmul.mubr.bf16.gmra.mrb[0].mxu0 %v106
    %v146 = vpop.f32.mrb[0].mxu0
    %v147 = vadd.f32 %v63, %v146
    %v148 = vpop.f32.mrb[0].mxu0
    %v149 = vpop.f32.mrb[0].mxu0
    %v150 = vadd.f32 %v63, %v149
    %v151 = vpop.f32.mrb[0].mxu0
    %152 = vdwg.mxu0
    %v153 = vmax.f32 %v147, 0.0
    %v154 = vmax.f32 %v150, 0.0
    %v155 = vpack.c.bf16 %v154, %v153
    %v156 = vld [vmem:[%s3] sm:$0xf]
    %v157 = vld [vmem:[%s3 + $0x4] sm:$0xf]
    %v158 = vld [vmem:[%s3 + $0x8] sm:$0xf]
    %v159 = vld [vmem:[%s3 + $0xc] sm:$0xf]
    %v160 = vld [vmem:[%s3 + $0x10] sm:$0xf]
    %v161 = vld [vmem:[%s3 + $0x14] sm:$0xf]
    %v162 = vld [vmem:[%s3 + $0x18] sm:$0xf]
    %v163 = vld [vmem:[%s3 + $0x1c] sm:$0xf]
    %v164 = vld [vmem:[%s3 + $0x20] sm:$0xf]
    %v165 = vld [vmem:[%s3 + $0x24] sm:$0xf]
    %v166 = vld [vmem:[%s3 + $0x28] sm:$0xf]
    %v167 = vld [vmem:[%s3 + $0x2c] sm:$0xf]
    %v168 = vld [vmem:[%s3 + $0x30] sm:$0xf]
    %v169 = vld [vmem:[%s3 + $0x34] sm:$0xf]
    %v170 = vld [vmem:[%s3 + $0x38] sm:$0xf]
    %v171 = vld [vmem:[%s3 + $0x3c] sm:$0xf]
    %v172 = vld [vmem:[%s4] sm:$0x1]
    %v174 = vlaneseq
    %v175 = vshrl.u32 %v174, 7
    %v176 = vsub.s32 0, %v175
    %v177 = vrot.slane %v172, %v176
    %v195 = vunpack.c.l.b16 %v156
    %v196 = vunpack.c.l.b16 %v157
    %v197 = vunpack.c.l.b16 %v158
    %v198 = vunpack.c.l.b16 %v159
    %v199 = vunpack.c.l.b16 %v160
    %v200 = vunpack.c.l.b16 %v161
    %v201 = vunpack.c.l.b16 %v162
    %v202 = vunpack.c.l.b16 %v163
    %v203 = vunpack.c.l.b16 %v164
    %v204 = vunpack.c.l.b16 %v165
    %v205 = vunpack.c.l.b16 %v166
    %v206 = vunpack.c.l.b16 %v167
    %v207 = vunpack.c.l.b16 %v168
    %v208 = vunpack.c.l.b16 %v169
    %v209 = vunpack.c.l.b16 %v170
    %v210 = vunpack.c.l.b16 %v171
    %v211 = vpack.c.b16 %v196, %v195
    %v212 = vpack.c.b16 %v198, %v197
    %v213 = vpack.c.b16 %v200, %v199
    %v214 = vpack.c.b16 %v202, %v201
    %v215 = vpack.c.b16 %v204, %v203
    %v216 = vpack.c.b16 %v206, %v205
    %v217 = vpack.c.b16 %v208, %v207
    %v218 = vpack.c.b16 %v210, %v209
    %227 = vmatprep.subr.bf16.mxu0 0
    %228 = vmatpush1.bf16.msra.mxu0 %v211
    %229 = vmatprep.subr.bf16.mxu0 0
    %230 = vmatpush1.bf16.msra.mxu0 %v212
    %231 = vmatprep.subr.bf16.mxu0 0
    %232 = vmatpush1.bf16.msra.mxu0 %v213
    %233 = vmatprep.subr.bf16.mxu0 0
    %234 = vmatpush1.bf16.msra.mxu0 %v214
    %235 = vmatprep.subr.bf16.mxu0 0
    %236 = vmatpush1.bf16.msra.mxu0 %v215
    %237 = vmatprep.subr.bf16.mxu0 0
    %238 = vmatpush1.bf16.msra.mxu0 %v216
    %239 = vmatprep.subr.bf16.mxu0 0
    %240 = vmatpush1.bf16.msra.mxu0 %v217
    %241 = vmatprep.subr.bf16.mxu0 0
    %242 = vmatpush1.bf16.msra.mxu0 %v218
    %243 = vmatprep.subr.bf16.mxu0 0
    %244 = vmatpush1.bf16.msra.mxu0 0
    %245 = vmatprep.subr.bf16.mxu0 0
    %246 = vmatpush1.bf16.msra.mxu0 0
    %247 = vmatprep.subr.bf16.mxu0 0
    %248 = vmatpush1.bf16.msra.mxu0 0
    %249 = vmatprep.subr.bf16.mxu0 0
    %250 = vmatpush1.bf16.msra.mxu0 0
    %251 = vmatprep.subr.bf16.mxu0 0
    %252 = vmatpush1.bf16.msra.mxu0 0
    %253 = vmatprep.subr.bf16.mxu0 0
    %254 = vmatpush1.bf16.msra.mxu0 0
    %255 = vmatprep.subr.bf16.mxu0 0
    %256 = vmatpush1.bf16.msra.mxu0 0
    %257 = vmatprep.subr.bf16.mxu0 0
    %258 = vmatpush1.bf16.msra.mxu0 0
    %259 = vmatprep.mubr.bf16.mxu0 0
    %260 = vmatmul.mubr.bf16.gmra.mrb[0].mxu0 %v155
    %v261 = vpop.f32.mrb[0].mxu0
    %v262 = vadd.f32 %v177, %v261
    %v263 = vpop.f32.mrb[0].mxu0
    %v264 = vpop.f32.mrb[0].mxu0
    %v265 = vadd.f32 %v177, %v264
    %v266 = vpop.f32.mrb[0].mxu0
    %267 = vdwg.mxu0
    %v268 = vmax.f32 %v262, 0.0
    %v269 = vmax.f32 %v265, 0.0
    %v270 = vpack.c.bf16 %v269, %v268
    %v271 = vld [vmem:[%s5] sm:$0xf]
    %v272 = vld [vmem:[%s5 + $0x4] sm:$0xf]
    %v273 = vld [vmem:[%s5 + $0x8] sm:$0xf]
    %v274 = vld [vmem:[%s5 + $0xc] sm:$0xf]
    %v275 = vld [vmem:[%s5 + $0x10] sm:$0xf]
    %v276 = vld [vmem:[%s5 + $0x14] sm:$0xf]
    %v277 = vld [vmem:[%s5 + $0x18] sm:$0xf]
    %v278 = vld [vmem:[%s5 + $0x1c] sm:$0xf]
    %v279 = vld [vmem:[%s5 + $0x20] sm:$0xf]
    %v280 = vld [vmem:[%s5 + $0x24] sm:$0xf]
    %v281 = vld [vmem:[%s5 + $0x28] sm:$0xf]
    %v282 = vld [vmem:[%s5 + $0x2c] sm:$0xf]
    %v283 = vld [vmem:[%s5 + $0x30] sm:$0xf]
    %v284 = vld [vmem:[%s5 + $0x34] sm:$0xf]
    %v285 = vld [vmem:[%s5 + $0x38] sm:$0xf]
    %v286 = vld [vmem:[%s5 + $0x3c] sm:$0xf]
    %v287 = vld [vmem:[%s6] sm:$0x1]
    %v289 = vlaneseq
    %v290 = vshrl.u32 %v289, 7
    %v291 = vsub.s32 0, %v290
    %v292 = vrot.slane %v287, %v291
    %v310 = vunpack.c.l.b16 %v271
    %v311 = vunpack.c.l.b16 %v272
    %v312 = vunpack.c.l.b16 %v273
    %v313 = vunpack.c.l.b16 %v274
    %v314 = vunpack.c.l.b16 %v275
    %v315 = vunpack.c.l.b16 %v276
    %v316 = vunpack.c.l.b16 %v277
    %v317 = vunpack.c.l.b16 %v278
    %v318 = vunpack.c.l.b16 %v279
    %v319 = vunpack.c.l.b16 %v280
    %v320 = vunpack.c.l.b16 %v281
    %v321 = vunpack.c.l.b16 %v282
    %v322 = vunpack.c.l.b16 %v283
    %v323 = vunpack.c.l.b16 %v284
    %v324 = vunpack.c.l.b16 %v285
    %v325 = vunpack.c.l.b16 %v286
    %v326 = vpack.c.b16 %v311, %v310
    %v327 = vpack.c.b16 %v313, %v312
    %v328 = vpack.c.b16 %v315, %v314
    %v329 = vpack.c.b16 %v317, %v316
    %v330 = vpack.c.b16 %v319, %v318
    %v331 = vpack.c.b16 %v321, %v320
    %v332 = vpack.c.b16 %v323, %v322
    %v333 = vpack.c.b16 %v325, %v324
    %342 = vmatprep.subr.bf16.mxu0 0
    %343 = vmatpush1.bf16.msra.mxu0 %v326
    %344 = vmatprep.subr.bf16.mxu0 0
    %345 = vmatpush1.bf16.msra.mxu0 %v327
    %346 = vmatprep.subr.bf16.mxu0 0
    %347 = vmatpush1.bf16.msra.mxu0 %v328
    %348 = vmatprep.subr.bf16.mxu0 0
    %349 = vmatpush1.bf16.msra.mxu0 %v329
    %350 = vmatprep.subr.bf16.mxu0 0
    %351 = vmatpush1.bf16.msra.mxu0 %v330
    %352 = vmatprep.subr.bf16.mxu0 0
    %353 = vmatpush1.bf16.msra.mxu0 %v331
    %354 = vmatprep.subr.bf16.mxu0 0
    %355 = vmatpush1.bf16.msra.mxu0 %v332
    %356 = vmatprep.subr.bf16.mxu0 0
    %357 = vmatpush1.bf16.msra.mxu0 %v333
    %358 = vmatprep.subr.bf16.mxu0 0
    %359 = vmatpush1.bf16.msra.mxu0 0
    %360 = vmatprep.subr.bf16.mxu0 0
    %361 = vmatpush1.bf16.msra.mxu0 0
    %362 = vmatprep.subr.bf16.mxu0 0
    %363 = vmatpush1.bf16.msra.mxu0 0
    %364 = vmatprep.subr.bf16.mxu0 0
    %365 = vmatpush1.bf16.msra.mxu0 0
    %366 = vmatprep.subr.bf16.mxu0 0
    %367 = vmatpush1.bf16.msra.mxu0 0
    %368 = vmatprep.subr.bf16.mxu0 0
    %369 = vmatpush1.bf16.msra.mxu0 0
    %370 = vmatprep.subr.bf16.mxu0 0
    %371 = vmatpush1.bf16.msra.mxu0 0
    %372 = vmatprep.subr.bf16.mxu0 0
    %373 = vmatpush1.bf16.msra.mxu0 0
    %374 = vmatprep.mubr.bf16.mxu0 0
    %375 = vmatmul.mubr.bf16.gmra.mrb[0].mxu0 %v270
    %v376 = vpop.f32.mrb[0].mxu0
    %v377 = vadd.f32 %v292, %v376
    %v378 = vpop.f32.mrb[0].mxu0
    %v379 = vpop.f32.mrb[0].mxu0
    %v380 = vadd.f32 %v292, %v379
    %v381 = vpop.f32.mrb[0].mxu0
    %382 = vdwg.mxu0
    %vm383 = vcmask 80896
    %v384 = vsel %vm383, %v377, -inf
    %385 = vmax.xlane.f32.xlu0 %v384
    %v386 = vpop.xlane.xlu0 %385
    %v387 = vsel %vm383, %v380, -inf
    %388 = vmax.xlane.f32.xlu0 %v387
    %v389 = vpop.xlane.xlu0 %388
    %v390 = vsub.f32 %v377, %v386
    %v391 = vsub.f32 %v380, %v389
    %v392 = vmul.f32 %v390, 1.442695
    %v393 = vpow.pop %v392
    %v394 = vmul.f32 %v391, 1.442695
    %v395 = vpow.pop %v394
    %v396 = vsel %vm383, %v393, 0.0
    %397 = vadd.xlane.f32.xlu0 %v396
    %v398 = vpop.xlane.xlu0 %397
    %v399 = vsel %vm383, %v395, 0.0
    %400 = vadd.xlane.f32.xlu0 %v399
    %v401 = vpop.xlane.xlu0 %400
    %v402 = vlog2.pop %v398
    %v403 = vmul.f32 %v402, 0.6931472
    %v404 = vlog2.pop %v401
    %v405 = vmul.f32 %v404, 0.6931472
    %v406 = vsub.f32 %v390, %v403
    %v407 = vsub.f32 %v391, %v405
    %408 = vst.msk [vmem:[#allocation5] sm:$0xff] %vm383, %v406
    %409 = vst.msk [vmem:[#allocation5 + $0x8] sm:$0xff] %vm383, %v407
    // Predicated region
    $region34: #{tpu_custom_call.1} parent=1 // pred_check
      _
    $region35: #{tpu_custom_call.1} parent=1 // pred_check_branch
      %411 = sbr.rel (0) target = $region37
    $region36: #{tpu_custom_call.1} parent=1 // pred_region
      %s413 = ssub.s32 256, 256
      %414 = vsyncadd [#allocation4], %s413
      %s415 = sshll.u32 [#allocation5], 4
      %s416 = int_to_ptr.vmem [resolvable:$true] %s415
      %421 = dma.vmem_to_hbm [thread:$0]  %s416, 256, %s7, [#allocation4], 128, 128, 8
    $region37: #{tpu_custom_call.1} parent=1 // pred_fallthru
      _
    // Predicated region
    $region38: #{tpu_custom_call.1} parent=1 // pred_check
      _
    $region39: #{tpu_custom_call.1} parent=1 // pred_check_branch
      %423 = sbr.rel (0) target = $region41
    $region40: #{tpu_custom_call.1} parent=1 // pred_region
      %424 = dma.done [#allocation4], 256
    $region41: #{tpu_custom_call.1} parent=1 // pred_fallthru
      _
    %425 = vsyncpa [#allocation3], 1
    %426 = vsyncpa [#allocation4], 1

</llo_original>
